<compile_context>
chip_gen: v5e
topology: v5e:2x2
jax: 0.10.0
libtpu: 0.0.40
codegen_flags: <defaults>
</compile_context>

<pallas_src>
import functools

import jax
import jax.numpy as jnp
from jax.experimental import pallas as pl
from jax.experimental.pallas import tpu as pltpu


def _round_up(n, m):
    return ((n + m - 1) // m) * m


def _manager_kernel(dims, offsets, x_ref, p_ref, out_ref):
    """Single-block kernel: encoder MLP + fused (policy+value) heads.

    out_ref is a lane-dense slab [batch_pad, 128]:
      columns [0, A*Z)    -> per-agent softmaxed policies (agent-major blocks)
      column  [A*Z]       -> value head output
      columns (A*Z, 128)  -> zero padding
    """
    obs_dim, h0, h1, h2, num_agents, num_zones = dims
    az = num_agents * num_zones
    o1, o2, o3, oh = offsets

    def linear(inp, off, in_dim, out_dim):
        w = p_ref[off:off + in_dim, :out_dim]             # [in, out]  (static slice)
        b = p_ref[off + in_dim:off + in_dim + 1, :out_dim]  # [1, out] broadcasts
        return jnp.dot(inp, w, preferred_element_type=jnp.float32) + b

    # --- shared encoder: Linear -> ReLU -> Linear -> ReLU -> Linear ---
    h = jnp.maximum(linear(x_ref[...], o1, obs_dim, h0), 0.0)
    h = jnp.maximum(linear(h, o2, h0, h1), 0.0)
    feats = linear(h, o3, h1, h2)

    # --- fused heads (all agents + value), 128-lane padded output ---
    heads = linear(feats, oh, h2, p_ref.shape[-1])        # [batch_pad, 128]

    # One unmasked full-width store: value column + zero padding land here.
    out_ref[...] = heads

    # Per-agent softmax: single exp over the whole policy block, per-agent
    # denominators, results written straight into out_ref lane slices
    # (no jnp.concatenate epilogue).
    pol = heads[:, :az]
    m = jnp.max(pol, axis=-1, keepdims=True)              # per-row shift (any uniform
    e = jnp.exp(pol - m)                                   # shift is exact per group)
    for a in range(num_agents):
        s0 = a * num_zones
        ea = e[:, s0:s0 + num_zones]
        out_ref[:, s0:s0 + num_zones] = ea / jnp.sum(ea, axis=-1, keepdims=True)


def pack_params(params, pad_n=128):
    """Pack every (w, b) pair (bias as an extra row), fuse all heads, pad
    columns to `pad_n` lanes and rows to multiples of 8, stack into one array.

    Returns (packed [R, pad_n] f32, row_offsets tuple of python ints).
    """
    blocks = []
    offsets = []
    row = 0

    def add(w, b):
        nonlocal row
        blk = jnp.concatenate([w, b], axis=0)                      # [in+1, out]
        rows = _round_up(blk.shape[0], 8)
        blk = jnp.pad(blk, ((0, rows - blk.shape[0]),
                            (0, pad_n - blk.shape[1])))
        offsets.append(row)
        blocks.append(blk.astype(jnp.float32))
        row += rows

    add(params["w1"], params["b1"])
    add(params["w2"], params["b2"])
    add(params["w3"], params["b3"])

    wp = params["wp"]                                              # [A, hidden, Z]
    bp = params["bp"]                                              # [A, 1, Z]
    A, hidden, Z = wp.shape
    assert pad_n >= A * Z + 1 and pad_n % 128 == 0
    w_heads = jnp.concatenate(
        [jnp.transpose(wp, (1, 0, 2)).reshape(hidden, A * Z), params["wv"]],
        axis=-1)                                                   # [hidden, A*Z+1]
    b_heads = jnp.concatenate([bp.reshape(1, A * Z), params["bv"]], axis=-1)
    add(w_heads, b_heads)

    packed = jnp.concatenate(blocks, axis=0)                       # [R, pad_n]
    return packed, tuple(offsets)


def manager_forward(x, packed, offsets, dims, pad_n=128):
    """Wrapper calling the Pallas kernel. Returns (policies, value)."""
    obs_dim, h0, h1, h2, num_agents, num_zones = dims
    batch = x.shape[0]
    az = num_agents * num_zones

    # Pad batch to a multiple of 8 rows (f32 sublane tile).
    batch_pad = _round_up(max(batch, 8), 8)
    if batch_pad != batch:
        x = jnp.pad(x, ((0, batch_pad - batch), (0, 0)))

    vmem_spec = pl.BlockSpec(memory_space=pltpu.MemorySpace.VMEM)
    kernel = functools.partial(_manager_kernel, dims, offsets)

    heads = pl.pallas_call(
        kernel,
        out_shape=jax.ShapeDtypeStruct((batch_pad, pad_n), jnp.float32),
        in_specs=[vmem_spec, vmem_spec],
        out_specs=vmem_spec,
    )(x, packed)

    # Layout plumbing (wrapper-side, not in-kernel):
    heads = heads[:batch]
    policies = heads[:, :az].reshape(batch, num_agents, num_zones).transpose(1, 0, 2)
    value = heads[:, az:az + 1]                                    # [batch, 1]
    return policies, value


def init_params(key, obs_dim, num_agents, num_zones, hidden_dims):
    """Deterministic parameter init (uniform fan-in, like torch.nn.Linear)."""
    h0, h1, h2 = hidden_dims

    def linear(key, fan_in, fan_out):
        kw, kb = jax.random.split(key)
        bound = 1.0 / jnp.sqrt(fan_in)
        w = jax.random.uniform(kw, (fan_in, fan_out), jnp.float32, -bound, bound)
        b = jax.random.uniform(kb, (1, fan_out), jnp.float32, -bound, bound)
        return w, b

    keys = jax.random.split(key, 5 + num_agents)
    w1, b1 = linear(keys[0], obs_dim, h0)
    w2, b2 = linear(keys[1], h0, h1)
    w3, b3 = linear(keys[2], h1, h2)

    wp_list, bp_list = [], []
    for a in range(num_agents):
        wpa, bpa = linear(keys[3 + a], h2, num_zones)
        wp_list.append(wpa)
        bp_list.append(bpa)
    wp = jnp.stack(wp_list, axis=0)               # [num_agents, hidden, num_zones]
    bp = jnp.stack(bp_list, axis=0)               # [num_agents, 1, num_zones]

    wv, bv = linear(keys[3 + num_agents], h2, 1)  # [hidden, 1], [1, 1]

    return dict(w1=w1, b1=b1, w2=w2, b2=b2, w3=w3, b3=b3,
                wp=wp, bp=bp, wv=wv, bv=bv)


def manager_forward_ref(x, params, num_agents):
    """Pure-JAX reference for sanity checking."""
    hp = jax.lax.Precision.HIGHEST
    h = jnp.maximum(jnp.dot(x, params["w1"], precision=hp) + params["b1"], 0.0)
    h = jnp.maximum(jnp.dot(h, params["w2"], precision=hp) + params["b2"], 0.0)
    feats = jnp.dot(h, params["w3"], precision=hp) + params["b3"]
    pols = []
    for a in range(num_agents):
        logits = jnp.dot(feats, params["wp"][a], precision=hp) + params["bp"][a]
        pols.append(jax.nn.softmax(logits, axis=-1))
    value = jnp.dot(feats, params["wv"], precision=hp) + params["bv"]
    return jnp.stack(pols, axis=0), value


if __name__ == "__main__":
    # Small, self-consistent shapes.
    batch = 4
    obs_dim = 32
    num_agents = 3
    num_zones = 8
    hidden_dims = [32, 32, 32]
    dims = (obs_dim, hidden_dims[0], hidden_dims[1], hidden_dims[2],
            num_agents, num_zones)

    key = jax.random.PRNGKey(0)
    k_params, k_x = jax.random.split(key)

    params = init_params(k_params, obs_dim, num_agents, num_zones, hidden_dims)
    packed, offsets = pack_params(params)
    x = jax.random.normal(k_x, (batch, obs_dim), dtype=jnp.float32)

    policies, value = manager_forward(x, packed, offsets, dims)
    policies = jax.block_until_ready(policies)
    value = jax.block_until_ready(value)

    # Cross-check against the pure-JAX reference.
    ref_policies, ref_value = manager_forward_ref(x, params, num_agents)
    assert policies.shape == (num_agents, batch, num_zones)
    assert value.shape == (batch, 1)
    assert jnp.allclose(policies, ref_policies, atol=1e-3, rtol=1e-3), (
        jnp.max(jnp.abs(policies - ref_policies)))
    assert jnp.allclose(value, ref_value, atol=1e-3, rtol=1e-3), (
        jnp.max(jnp.abs(value - ref_value)))
    # Exact divide in the kernel -> rows sum to 1 within f32 rounding.
    assert jnp.allclose(jnp.sum(policies, axis=-1), 1.0, atol=1e-5)

    print("KERNEL_OK")
</pallas_src>

<mosaic_0001>
module attributes {stable_mosaic.version = 11 : i64} {
  func.func @_manager_kernel(%arg0: memref<8x32xf32, #tpu.memory_space<vmem>>, %arg1: memref<160x128xf32, #tpu.memory_space<vmem>>, %arg2: memref<8x128xf32, #tpu.memory_space<vmem>>) attributes {dimension_semantics = [], scalar_prefetch = 0 : i64, scratch_operands = 0 : i64, tpu.core_type = #tpu.core_type<tc>} {
    %c0 = arith.constant 0 : index
    %c0_0 = arith.constant 0 : index
    %0 = vector.load %arg0[%c0, %c0_0] : memref<8x32xf32, #tpu.memory_space<vmem>>, vector<8x32xf32>
    %c0_1 = arith.constant 0 : index
    %c0_2 = arith.constant 0 : index
    %1 = vector.load %arg1[%c0_1, %c0_2] : memref<160x128xf32, #tpu.memory_space<vmem>>, vector<32x32xf32>
    %c32 = arith.constant 32 : index
    %c0_3 = arith.constant 0 : index
    %2 = vector.load %arg1[%c32, %c0_3] : memref<160x128xf32, #tpu.memory_space<vmem>>, vector<1x32xf32>
    %cst = arith.constant dense<0.000000e+00> : vector<8x32xf32>
    %3 = tpu.matmul %0, %1, %cst {dimension_numbers = #tpu.dot_dimension_numbers<[1], [0], [0], [1], [0, 0, 1, 1], [], []>} : vector<8x32xf32>, vector<32x32xf32>, vector<8x32xf32> -> vector<8x32xf32>
    %4 = vector.broadcast %2 : vector<1x32xf32> to vector<8x32xf32>
    %5 = arith.addf %3, %4 : vector<8x32xf32>
    %cst_4 = arith.constant 0.000000e+00 : f32
    %6 = vector.broadcast %cst_4 : f32 to vector<8x32xf32>
    %7 = arith.maximumf %5, %6 : vector<8x32xf32>
    %c40 = arith.constant 40 : index
    %c0_5 = arith.constant 0 : index
    %8 = vector.load %arg1[%c40, %c0_5] : memref<160x128xf32, #tpu.memory_space<vmem>>, vector<32x32xf32>
    %c72 = arith.constant 72 : index
    %c0_6 = arith.constant 0 : index
    %9 = vector.load %arg1[%c72, %c0_6] : memref<160x128xf32, #tpu.memory_space<vmem>>, vector<1x32xf32>
    %cst_7 = arith.constant dense<0.000000e+00> : vector<8x32xf32>
    %10 = tpu.matmul %7, %8, %cst_7 {dimension_numbers = #tpu.dot_dimension_numbers<[1], [0], [0], [1], [0, 0, 1, 1], [], []>} : vector<8x32xf32>, vector<32x32xf32>, vector<8x32xf32> -> vector<8x32xf32>
    %11 = vector.broadcast %9 : vector<1x32xf32> to vector<8x32xf32>
    %12 = arith.addf %10, %11 : vector<8x32xf32>
    %cst_8 = arith.constant 0.000000e+00 : f32
    %13 = vector.broadcast %cst_8 : f32 to vector<8x32xf32>
    %14 = arith.maximumf %12, %13 : vector<8x32xf32>
    %c80 = arith.constant 80 : index
    %c0_9 = arith.constant 0 : index
    %15 = vector.load %arg1[%c80, %c0_9] : memref<160x128xf32, #tpu.memory_space<vmem>>, vector<32x32xf32>
    %c112 = arith.constant 112 : index
    %c0_10 = arith.constant 0 : index
    %16 = vector.load %arg1[%c112, %c0_10] : memref<160x128xf32, #tpu.memory_space<vmem>>, vector<1x32xf32>
    %cst_11 = arith.constant dense<0.000000e+00> : vector<8x32xf32>
    %17 = tpu.matmul %14, %15, %cst_11 {dimension_numbers = #tpu.dot_dimension_numbers<[1], [0], [0], [1], [0, 0, 1, 1], [], []>} : vector<8x32xf32>, vector<32x32xf32>, vector<8x32xf32> -> vector<8x32xf32>
    %18 = vector.broadcast %16 : vector<1x32xf32> to vector<8x32xf32>
    %19 = arith.addf %17, %18 : vector<8x32xf32>
    %c120 = arith.constant 120 : index
    %c0_12 = arith.constant 0 : index
    %20 = vector.load %arg1[%c120, %c0_12] : memref<160x128xf32, #tpu.memory_space<vmem>>, vector<32x128xf32>
    %c152 = arith.constant 152 : index
    %c0_13 = arith.constant 0 : index
    %21 = vector.load %arg1[%c152, %c0_13] : memref<160x128xf32, #tpu.memory_space<vmem>>, vector<1x128xf32>
    %cst_14 = arith.constant dense<0.000000e+00> : vector<8x128xf32>
    %22 = tpu.matmul %19, %20, %cst_14 {dimension_numbers = #tpu.dot_dimension_numbers<[1], [0], [0], [1], [0, 0, 1, 1], [], []>} : vector<8x32xf32>, vector<32x128xf32>, vector<8x128xf32> -> vector<8x128xf32>
    %23 = vector.broadcast %21 : vector<1x128xf32> to vector<8x128xf32>
    %24 = arith.addf %22, %23 : vector<8x128xf32>
    %c0_15 = arith.constant 0 : index
    %c0_16 = arith.constant 0 : index
    %25 = vector.load %arg2[%c0_15, %c0_16] : memref<8x128xf32, #tpu.memory_space<vmem>>, vector<8x128xf32>
    tpu.vector_store %arg2[%c0_15, %c0_16], %24 {strides = array<i32>} : memref<8x128xf32, #tpu.memory_space<vmem>>, vector<8x128xf32>,
    %26 = vector.extract_strided_slice %24 {offsets = [0, 0], sizes = [8, 24], strides = [1, 1]} : vector<8x128xf32> to vector<8x24xf32>
    %cst_17 = arith.constant dense<0xFF800000> : vector<8xf32>
    %27 = vector.multi_reduction <maximumf>, %26, %cst_17 [1] : vector<8x24xf32> to vector<8xf32>
    %28 = vector.shape_cast %27 : vector<8xf32> to vector<8x1xf32>
    %29 = vector.broadcast %28 : vector<8x1xf32> to vector<8x24xf32>
    %30 = arith.subf %26, %29 : vector<8x24xf32>
    %31 = math.exp %30 : vector<8x24xf32>
    %32 = vector.extract_strided_slice %31 {offsets = [0, 0], sizes = [8, 8], strides = [1, 1]} : vector<8x24xf32> to vector<8x8xf32>
    %cst_18 = arith.constant dense<0.000000e+00> : vector<8xf32>
    %33 = vector.multi_reduction <add>, %32, %cst_18 [1] : vector<8x8xf32> to vector<8xf32>
    %34 = vector.shape_cast %33 : vector<8xf32> to vector<8x1xf32>
    %35 = vector.broadcast %34 : vector<8x1xf32> to vector<8x8xf32>
    %36 = arith.divf %32, %35 : vector<8x8xf32>
    %c0_19 = arith.constant 0 : index
    %c0_20 = arith.constant 0 : index
    %37 = vector.load %arg2[%c0_19, %c0_20] : memref<8x128xf32, #tpu.memory_space<vmem>>, vector<8x8xf32>
    tpu.vector_store %arg2[%c0_19, %c0_20], %36 {strides = array<i32>} : memref<8x128xf32, #tpu.memory_space<vmem>>, vector<8x8xf32>,
    %38 = vector.extract_strided_slice %31 {offsets = [0, 8], sizes = [8, 8], strides = [1, 1]} : vector<8x24xf32> to vector<8x8xf32>
    %cst_21 = arith.constant dense<0.000000e+00> : vector<8xf32>
    %39 = vector.multi_reduction <add>, %38, %cst_21 [1] : vector<8x8xf32> to vector<8xf32>
    %40 = vector.shape_cast %39 : vector<8xf32> to vector<8x1xf32>
    %41 = vector.broadcast %40 : vector<8x1xf32> to vector<8x8xf32>
    %42 = arith.divf %38, %41 : vector<8x8xf32>
    %c0_22 = arith.constant 0 : index
    %c8 = arith.constant 8 : index
    %43 = vector.load %arg2[%c0_22, %c8] : memref<8x128xf32, #tpu.memory_space<vmem>>, vector<8x8xf32>
    tpu.vector_store %arg2[%c0_22, %c8], %42 {strides = array<i32>} : memref<8x128xf32, #tpu.memory_space<vmem>>, vector<8x8xf32>,
    %44 = vector.extract_strided_slice %31 {offsets = [0, 16], sizes = [8, 8], strides = [1, 1]} : vector<8x24xf32> to vector<8x8xf32>
    %cst_23 = arith.constant dense<0.000000e+00> : vector<8xf32>
    %45 = vector.multi_reduction <add>, %44, %cst_23 [1] : vector<8x8xf32> to vector<8xf32>
    %46 = vector.shape_cast %45 : vector<8xf32> to vector<8x1xf32>
    %47 = vector.broadcast %46 : vector<8x1xf32> to vector<8x8xf32>
    %48 = arith.divf %44, %47 : vector<8x8xf32>
    %c0_24 = arith.constant 0 : index
    %c16 = arith.constant 16 : index
    %49 = vector.load %arg2[%c0_24, %c16] : memref<8x128xf32, #tpu.memory_space<vmem>>, vector<8x8xf32>
    tpu.vector_store %arg2[%c0_24, %c16], %48 {strides = array<i32>} : memref<8x128xf32, #tpu.memory_space<vmem>>, vector<8x8xf32>,
    return
  }
}

</mosaic_0001>

<llo_original>
// kernel: tpu_custom_call.1
$region0: #{tpu_custom_call.1}
  #allocation0 [shape = 'u32[]', space=smem, size = 0x4, offset = 0x4, fixed_abs, tag = 'smem constant byte address 0x4 - core index']
  #allocation1 [shape = 'u32[72,128]{1,0:T(1,128)}', space=vmem, size = 0x9000, scoped, tag = 'internal scratch']
  %s0 = inlined_call_operand.hbm [shape: f32[8,32], index: 0, kind: input, shape index: {}]
  %s1 = inlined_call_operand.hbm [shape: f32[160,128], index: 1, kind: input, shape index: {}]
  %s2 = inlined_call_operand.hbm [shape: f32[8,128], index: 2, kind: output, shape index: {}]
  %s3 = sld [smem:[#allocation0]]
  $region26: #{tpu_custom_call.1} parent=0
    _
  %s5 = ssub.s32 1, %s3
  %s6 = scalar_select 0, %s5, %s3
  $region1: #{tpu_custom_call.1} parent=0
    #allocation2 [shape = 'u8[4096]{0}', space=vmem, size = 0x1000, scoped, tag = 'input window, operand 0, single buffered']
    #allocation3 [shape = 's32[1]{0}', space=sflag, size = 0x4, scoped, tag = 'scoped memory for tpu_custom_call.1']
    #allocation4 [shape = 's32[1]{0}', space=sflag, size = 0x4, scoped, tag = 'scoped memory for tpu_custom_call.1']
    #allocation5 [shape = 'u8[81920]{0}', space=vmem, size = 0x14000, scoped, tag = 'input window, operand 1, single buffered']
    #allocation6 [shape = 's32[1]{0}', space=sflag, size = 0x4, scoped, tag = 'scoped memory for tpu_custom_call.1']
    #allocation7 [shape = 'u8[4096]{0}', space=vmem, size = 0x1000, scoped, tag = 'output window, operand 0, single buffered']
    %7 = vsyncpa [#allocation3], 0
    %8 = vsyncpa [#allocation6], 0
    %9 = vsyncpa [#allocation4], 0
    // Predicated region
    $region2: #{tpu_custom_call.1} parent=1 // pred_check
      _
    $region3: #{tpu_custom_call.1} parent=1 // pred_check_branch
      %11 = sbr.rel (0) target = $region5
    $region4: #{tpu_custom_call.1} parent=1 // pred_region
      %13 = vsyncadd [#allocation3], 0
      %s15 = sshll.u32 %s0, 4
      %s16 = int_to_ptr.hbm [resolvable:$true] %s15
      %s17 = sshll.u32 [#allocation2], 4
      %s18 = int_to_ptr.vmem [resolvable:$true] %s17
      %20 = dma.hbm_to_vmem [thread:$0]  %s16, 128, %s18, [#allocation3]
    $region5: #{tpu_custom_call.1} parent=1 // pred_fallthru
      _
    // Predicated region
    $region6: #{tpu_custom_call.1} parent=1 // pred_check
      _
    $region7: #{tpu_custom_call.1} parent=1 // pred_check_branch
      %22 = sbr.rel (0) target = $region9
    $region8: #{tpu_custom_call.1} parent=1 // pred_region
      %24 = vsyncadd [#allocation6], 0
      %s25 = sshll.u32 %s1, 4
      %s26 = int_to_ptr.hbm [resolvable:$true] %s25
      %s27 = sshll.u32 [#allocation5], 4
      %s28 = int_to_ptr.vmem [resolvable:$true] %s27
      %33 = dma.hbm_to_vmem [thread:$0]  %s26, 2560, %s28, [#allocation6], 128, 128, 8
    $region9: #{tpu_custom_call.1} parent=1 // pred_fallthru
      _
    // Predicated region
    $region10: #{tpu_custom_call.1} parent=1 // pred_check
      _
    $region11: #{tpu_custom_call.1} parent=1 // pred_check_branch
      %35 = sbr.rel (0) target = $region13
    $region12: #{tpu_custom_call.1} parent=1 // pred_region
      %37 = dma.done [#allocation3], 128
    $region13: #{tpu_custom_call.1} parent=1 // pred_fallthru
      _
    // Predicated region
    $region14: #{tpu_custom_call.1} parent=1 // pred_check
      _
    $region15: #{tpu_custom_call.1} parent=1 // pred_check_branch
      %39 = sbr.rel (0) target = $region17
    $region16: #{tpu_custom_call.1} parent=1 // pred_region
      %41 = dma.done [#allocation6], 2560
    $region17: #{tpu_custom_call.1} parent=1 // pred_fallthru
      _
    %v42 = vld [vmem:[#allocation2] sm:$0xff]
    %v43 = vld [vmem:[#allocation5] sm:$0xff]
    %v44 = vld [vmem:[#allocation5 + $0x8] sm:$0xff]
    %v45 = vld [vmem:[#allocation5 + $0x10] sm:$0xff]
    %v46 = vld [vmem:[#allocation5 + $0x18] sm:$0xff]
    %v47 = vld [vmem:[#allocation5 + $0x20] sm:$0x1]
    %v48 = vperm.slane %v47, 0
    %vm49 = vcmask 261120
    %v51 = vsel %vm49, %v42, 0
    %53 = vmatpush.msra.mxu0 0.0
    %54 = vmatpush.msra.mxu0 0.0
    %55 = vmatpush.msra.mxu0 0.0
    %56 = vmatpush.msra.mxu0 0.0
    %57 = vmatpush.msra.mxu0 0.0
    %58 = vmatpush.msra.mxu0 0.0
    %59 = vmatpush.msra.mxu0 0.0
    %60 = vmatpush.msra.mxu0 0.0
    %61 = vmatpush.msra.mxu0 0.0
    %62 = vmatpush.msra.mxu0 0.0
    %63 = vmatpush.msra.mxu0 0.0
    %64 = vmatpush.msra.mxu0 0.0
    %65 = vmatpush.msra.mxu0 %v46
    %66 = vmatpush.msra.mxu0 %v45
    %67 = vmatpush.msra.mxu0 %v44
    %68 = vmatpush.msra.mxu0 %v43
    %69 = vmatmul.f32.gmra.mxu0 %v51
    %v70 = vpop.f32.mrf.mxu0
    %v71 = vadd.f32 %v48, %v70
    %72 = vdwg.mxu0
    %v73 = vmax.f32 %v71, 0.0
    %v74 = vld [vmem:[#allocation5 + $0x28] sm:$0xff]
    %v75 = vld [vmem:[#allocation5 + $0x30] sm:$0xff]
    %v76 = vld [vmem:[#allocation5 + $0x38] sm:$0xff]
    %v77 = vld [vmem:[#allocation5 + $0x40] sm:$0xff]
    %v78 = vld [vmem:[#allocation5 + $0x48] sm:$0x1]
    %v79 = vperm.slane %v78, 0
    %v81 = vsel %vm49, %v73, 0
    %83 = vmatpush.msra.mxu0 0.0
    %84 = vmatpush.msra.mxu0 0.0
    %85 = vmatpush.msra.mxu0 0.0
    %86 = vmatpush.msra.mxu0 0.0
    %87 = vmatpush.msra.mxu0 0.0
    %88 = vmatpush.msra.mxu0 0.0
    %89 = vmatpush.msra.mxu0 0.0
    %90 = vmatpush.msra.mxu0 0.0
    %91 = vmatpush.msra.mxu0 0.0
    %92 = vmatpush.msra.mxu0 0.0
    %93 = vmatpush.msra.mxu0 0.0
    %94 = vmatpush.msra.mxu0 0.0
    %95 = vmatpush.msra.mxu0 %v77
    %96 = vmatpush.msra.mxu0 %v76
    %97 = vmatpush.msra.mxu0 %v75
    %98 = vmatpush.msra.mxu0 %v74
    %99 = vmatmul.f32.gmra.mxu0 %v81
    %v100 = vpop.f32.mrf.mxu0
    %v101 = vadd.f32 %v79, %v100
    %102 = vdwg.mxu0
    %v103 = vmax.f32 %v101, 0.0
    %v104 = vld [vmem:[#allocation5 + $0x50] sm:$0xff]
    %v105 = vld [vmem:[#allocation5 + $0x58] sm:$0xff]
    %v106 = vld [vmem:[#allocation5 + $0x60] sm:$0xff]
    %v107 = vld [vmem:[#allocation5 + $0x68] sm:$0xff]
    %v108 = vld [vmem:[#allocation5 + $0x70] sm:$0x1]
    %v109 = vperm.slane %v108, 0
    %v111 = vsel %vm49, %v103, 0
    %113 = vmatpush.msra.mxu0 0.0
    %114 = vmatpush.msra.mxu0 0.0
    %115 = vmatpush.msra.mxu0 0.0
    %116 = vmatpush.msra.mxu0 0.0
    %117 = vmatpush.msra.mxu0 0.0
    %118 = vmatpush.msra.mxu0 0.0
    %119 = vmatpush.msra.mxu0 0.0
    %120 = vmatpush.msra.mxu0 0.0
    %121 = vmatpush.msra.mxu0 0.0
    %122 = vmatpush.msra.mxu0 0.0
    %123 = vmatpush.msra.mxu0 0.0
    %124 = vmatpush.msra.mxu0 0.0
    %125 = vmatpush.msra.mxu0 %v107
    %126 = vmatpush.msra.mxu0 %v106
    %127 = vmatpush.msra.mxu0 %v105
    %128 = vmatpush.msra.mxu0 %v104
    %129 = vmatmul.f32.gmra.mxu0 %v111
    %v130 = vpop.f32.mrf.mxu0
    %v131 = vadd.f32 %v109, %v130
    %132 = vdwg.mxu0
    %v133 = vld [vmem:[#allocation5 + $0x78] sm:$0xff]
    %v134 = vld [vmem:[#allocation5 + $0x80] sm:$0xff]
    %v135 = vld [vmem:[#allocation5 + $0x88] sm:$0xff]
    %v136 = vld [vmem:[#allocation5 + $0x90] sm:$0xff]
    %v137 = vld [vmem:[#allocation5 + $0x98] sm:$0x1]
    %v138 = vperm.slane %v137, 0
    %v140 = vsel %vm49, %v131, 0
    %142 = vmatpush.msra.mxu0 0.0
    %143 = vmatpush.msra.mxu0 0.0
    %144 = vmatpush.msra.mxu0 0.0
    %145 = vmatpush.msra.mxu0 0.0
    %146 = vmatpush.msra.mxu0 0.0
    %147 = vmatpush.msra.mxu0 0.0
    %148 = vmatpush.msra.mxu0 0.0
    %149 = vmatpush.msra.mxu0 0.0
    %150 = vmatpush.msra.mxu0 0.0
    %151 = vmatpush.msra.mxu0 0.0
    %152 = vmatpush.msra.mxu0 0.0
    %153 = vmatpush.msra.mxu0 0.0
    %154 = vmatpush.msra.mxu0 %v136
    %155 = vmatpush.msra.mxu0 %v135
    %156 = vmatpush.msra.mxu0 %v134
    %157 = vmatpush.msra.mxu0 %v133
    %158 = vmatmul.f32.gmra.mxu0 %v140
    %v159 = vpop.f32.mrf.mxu0
    %v160 = vadd.f32 %v138, %v159
    %161 = vdwg.mxu0
    %162 = vst [vmem:[#allocation7] sm:$0xff] %v160
    %vm163 = vcmask 195584
    %v164 = vsel %vm163, %v160, -inf
    %165 = vmax.xlane.f32.xlu0 %v164
    %v166 = vpop.xlane.xlu0 %165
    %v167 = vsub.f32 %v160, %v166
    %v168 = vmul.f32 %v167, 1.442695
    %v169 = vpow.pop %v168
    %vm170 = vcmask 64512
    %v171 = vsel %vm170, %v169, 0.0
    %172 = vadd.xlane.f32.xlu0 %v171
    %v173 = vpop.xlane.xlu0 %172
    %v174 = vrcp.pop %v173
    %v175 = vmul.f32 %v173, %v174
    %v176 = vsub.f32 1.0, %v175
    %v177 = vmul.f32 %v174, %v176
    %v178 = vadd.f32 %v174, %v177
    %vm179 = vweird.f32 %v173
    %vm180 = vweird.f32 %v174
    %vm181 = vmor %vm179, %vm180
    %v182 = vsel %vm181, %v174, %v178
    %v183 = vand.u32 2147483647, %v173
    %vm184 = vcmp.eq.f32.partialorder %v183, 8.507059e+37
    %v185 = vand.u32 %v173, 2147483648
    %v186 = vor.u32 1.1754944e-38, %v185
    %v187 = vsel %vm184, %v186, %v182
    %v188 = vmul.f32 %v169, %v187
    %189 = vst.msk [vmem:[#allocation7] sm:$0xff] %vm170, %v188
    %191 = vrot.lane.b32.xlu0 %v169, 120
    %v192 = vpop.permute.xlu0 %191
    %v194 = vsel %vm170, %v192, 0.0
    %195 = vadd.xlane.f32.xlu0 %v194
    %v196 = vpop.xlane.xlu0 %195
    %v197 = vrcp.pop %v196
    %v198 = vmul.f32 %v196, %v197
    %v199 = vsub.f32 1.0, %v198
    %v200 = vmul.f32 %v197, %v199
    %v201 = vadd.f32 %v197, %v200
    %vm202 = vweird.f32 %v196
    %vm203 = vweird.f32 %v197
    %vm204 = vmor %vm202, %vm203
    %v205 = vsel %vm204, %v197, %v201
    %v206 = vand.u32 2147483647, %v196
    %vm207 = vcmp.eq.f32.partialorder %v206, 8.507059e+37
    %v208 = vand.u32 %v196, 2147483648
    %v209 = vor.u32 1.1754944e-38, %v208
    %v210 = vsel %vm207, %v209, %v205
    %v211 = vmul.f32 %v169, %v210
    %vm212 = vcmask 130112
    %213 = vst.msk [vmem:[#allocation7] sm:$0xff] %vm212, %v211
    %214 = vrot.lane.b32.xlu0 %v169, 112
    %v215 = vpop.permute.xlu0 %214
    %v217 = vsel %vm170, %v215, 0.0
    %218 = vadd.xlane.f32.xlu0 %v217
    %v219 = vpop.xlane.xlu0 %218
    %v220 = vrcp.pop %v219
    %v221 = vmul.f32 %v219, %v220
    %v222 = vsub.f32 1.0, %v221
    %v223 = vmul.f32 %v220, %v222
    %v224 = vadd.f32 %v220, %v223
    %vm225 = vweird.f32 %v219
    %vm226 = vweird.f32 %v220
    %vm227 = vmor %vm225, %vm226
    %v228 = vsel %vm227, %v220, %v224
    %v229 = vand.u32 2147483647, %v219
    %vm230 = vcmp.eq.f32.partialorder %v229, 8.507059e+37
    %v231 = vand.u32 %v219, 2147483648
    %v232 = vor.u32 1.1754944e-38, %v231
    %v233 = vsel %vm230, %v232, %v228
    %v234 = vmul.f32 %v169, %v233
    %vm235 = vcmask 195712
    %236 = vst.msk [vmem:[#allocation7] sm:$0xff] %vm235, %v234
    // Predicated region
    $region18: #{tpu_custom_call.1} parent=1 // pred_check
      _
    $region19: #{tpu_custom_call.1} parent=1 // pred_check_branch
      %238 = sbr.rel (0) target = $region21
    $region20: #{tpu_custom_call.1} parent=1 // pred_region
      %240 = vsyncadd [#allocation4], 0
      %s242 = sshll.u32 [#allocation7], 4
      %s243 = int_to_ptr.vmem [resolvable:$true] %s242
      %s244 = sshll.u32 %s2, 4
      %s245 = int_to_ptr.hbm [resolvable:$true] %s244
      %247 = dma.vmem_to_hbm [thread:$0]  %s243, 128, %s245, [#allocation4]
    $region21: #{tpu_custom_call.1} parent=1 // pred_fallthru
      _
    // Predicated region
    $region22: #{tpu_custom_call.1} parent=1 // pred_check
      _
    $region23: #{tpu_custom_call.1} parent=1 // pred_check_branch
      %249 = sbr.rel (0) target = $region25
    $region24: #{tpu_custom_call.1} parent=1 // pred_region
      %251 = dma.done [#allocation4], 128
    $region25: #{tpu_custom_call.1} parent=1 // pred_fallthru
      _
    %252 = vsyncpa [#allocation3], 1
    %253 = vsyncpa [#allocation6], 1
    %254 = vsyncpa [#allocation4], 1

</llo_original>
